<compile_context>
chip_gen: v7x
topology: tpu7x:2x2x1
jax: 0.10.0
libtpu: 0.0.40
codegen_flags: <defaults>
</compile_context>

<pallas_src>
import functools

import jax
import jax.numpy as jnp
import numpy as np
from jax.experimental import pallas as pl
from jax.experimental.pallas import tpu as pltpu


# ---- scale-mixture prior constants (divides folded into multiplies) -------------
_FRAC = 0.5
_SIGMA_WIDE = 1.0
_SIGMA_NARROW = 0.002
_C_WIDE = _FRAC / _SIGMA_WIDE
_C_NARROW = (1.0 - _FRAC) / _SIGMA_WIDE        # narrow term / sigma_wide: matches torch ref
_NHI_WIDE = -0.5 / (_SIGMA_WIDE * _SIGMA_WIDE)
_NHI_NARROW = -0.5 / (_SIGMA_NARROW * _SIGMA_NARROW)


def _log_mixed_prior(x):
    x2 = jnp.square(x)
    return jnp.log(_C_WIDE * jnp.exp(_NHI_WIDE * x2)
                   + _C_NARROW * jnp.exp(_NHI_NARROW * x2))


def _bayes_linear_kernel(x_ref, wmu_ref, wrho_ref, weps_ref,
                         bmu_ref, brho_ref, beps_ref,
                         y_ref, logq_ref, logp_ref,
                         acc_ref, *, out_features, in_features, tn, tk):
    n = pl.program_id(0)
    k = pl.program_id(1)

    # ---- reparameterized sampling (f32 elementwise math on all generations) ----
    w_mu = wmu_ref[...]
    w_rho = wrho_ref[...]
    w_eps = weps_ref[...]
    w_sigma = jnp.log(1.0 + jnp.exp(w_rho))
    weight = w_mu + w_sigma * w_eps

    b_mu = bmu_ref[...]
    b_rho = brho_ref[...]
    b_eps = beps_ref[...]
    b_sigma = jnp.log(1.0 + jnp.exp(b_rho))
    bias = b_mu + b_sigma * b_eps

    # ---- validity masks for zero-padded tiles -----------------------------------
    row = jax.lax.broadcasted_iota(jnp.int32, (tn, tk), 0) + n * tn
    col = jax.lax.broadcasted_iota(jnp.int32, (tn, tk), 1) + k * tk
    w_valid = (row < out_features) & (col < in_features)
    b_valid = (jax.lax.broadcasted_iota(jnp.int32, (1, tn), 1) + n * tn) < out_features

    # ---- log_q / log_p partial sums ----------------------------------------------
    # Exact identity: weight - mu == sigma * eps  =>  posterior term = -0.5*eps^2 - log(sigma)
    logq_w = jnp.where(w_valid, -0.5 * jnp.square(w_eps) - jnp.log(w_sigma), 0.0)
    logp_w = jnp.where(w_valid, _log_mixed_prior(weight), 0.0)
    logq_part = jnp.sum(logq_w)
    logp_part = jnp.sum(logp_w)

    # bias contributions counted once per output tile (only at the first K step)
    logq_b = jnp.where(b_valid, -0.5 * jnp.square(b_eps) - jnp.log(b_sigma), 0.0)
    logp_b = jnp.where(b_valid, _log_mixed_prior(bias), 0.0)
    first_k = (k == 0).astype(jnp.float32)
    logq_part = logq_part + first_k * jnp.sum(logq_b)
    logp_part = logp_part + first_k * jnp.sum(logp_b)

    # Write the per-block partial into a lane-dense (8,128) tile (scalar at [0,0]).
    hot = ((jax.lax.broadcasted_iota(jnp.int32, (8, 128), 0) == 0) &
           (jax.lax.broadcasted_iota(jnp.int32, (8, 128), 1) == 0))
    logq_ref[...] = jnp.where(hot, logq_part, 0.0)
    logp_ref[...] = jnp.where(hot, logp_part, 0.0)

    # ---- y = x @ weight.T + bias (accumulate over K tiles) -----------------------
    @pl.when(k == 0)
    def _():
        acc_ref[...] = jnp.zeros_like(acc_ref)

    acc_ref[...] += jax.lax.dot_general(
        x_ref[...].astype(jnp.bfloat16), weight.astype(jnp.bfloat16),
        dimension_numbers=(((1,), (1,)), ((), ())),
        preferred_element_type=jnp.float32)

    # y block is resident across k; only the final value is written back to HBM.
    y_ref[...] = (acc_ref[...] + bias).astype(y_ref.dtype)


def _round_up(a, m):
    return ((a + m - 1) // m) * m


def bayes_linear_forward(x, w_mu, w_rho, w_eps, b_mu, b_rho, b_eps):
    B, In = x.shape
    Out = w_mu.shape[0]
    f32 = jnp.float32

    # Lane-dense tiles (multiples of 128); sized so 3 double-buffered f32 weight
    # streams (~6 MiB at 256x512) fit comfortably under every generation's default
    # scoped VMEM limit (16 MiB v5e .. 32 MiB v6e/v7x).
    tk = min(512, _round_up(In, 128))
    tn = min(256, _round_up(Out, 128))
    in_p = _round_up(In, tk)
    out_p = _round_up(Out, tn)
    b_p = _round_up(B, 8)
    gn = out_p // tn
    gk = in_p // tk

    # Zero padding: padded weights sample to exactly 0, so the matmul needs no mask;
    # log_q / log_p are masked inside the kernel.
    xp = jnp.zeros((b_p, in_p), f32).at[:B, :In].set(x.astype(f32))
    wmu_p = jnp.zeros((out_p, in_p), f32).at[:Out, :In].set(w_mu.astype(f32))
    wrho_p = jnp.zeros((out_p, in_p), f32).at[:Out, :In].set(w_rho.astype(f32))
    weps_p = jnp.zeros((out_p, in_p), f32).at[:Out, :In].set(w_eps.astype(f32))
    bmu_p = jnp.zeros((1, out_p), f32).at[0, :Out].set(b_mu.astype(f32))
    brho_p = jnp.zeros((1, out_p), f32).at[0, :Out].set(b_rho.astype(f32))
    beps_p = jnp.zeros((1, out_p), f32).at[0, :Out].set(b_eps.astype(f32))

    w_spec = pl.BlockSpec((tn, tk), lambda n, k: (n, k))
    b_spec = pl.BlockSpec((1, tn), lambda n, k: (0, n))
    x_spec = pl.BlockSpec((b_p, tk), lambda n, k: (0, k))
    y_spec = pl.BlockSpec((b_p, tn), lambda n, k: (0, n))
    part_spec = pl.BlockSpec((8, 128), lambda n, k: (n, k))

    kernel = functools.partial(_bayes_linear_kernel,
                               out_features=Out, in_features=In, tn=tn, tk=tk)

    cost = pl.CostEstimate(
        flops=2 * B * Out * In,
        transcendentals=5 * Out * In,
        bytes_accessed=3 * Out * In * 4 + B * In * 4 + B * Out * 4)

    y_p, logq_tiles, logp_tiles = pl.pallas_call(
        kernel,
        out_shape=(
            jax.ShapeDtypeStruct((b_p, out_p), f32),
            jax.ShapeDtypeStruct((gn * 8, gk * 128), f32),
            jax.ShapeDtypeStruct((gn * 8, gk * 128), f32),
        ),
        grid_spec=pltpu.PrefetchScalarGridSpec(
            num_scalar_prefetch=0,
            grid=(gn, gk),
            in_specs=[x_spec, w_spec, w_spec, w_spec, b_spec, b_spec, b_spec],
            out_specs=(y_spec, part_spec, part_spec),
            scratch_shapes=[pltpu.VMEM((b_p, tn), jnp.float32)]),
        compiler_params=pltpu.CompilerParams(
            dimension_semantics=("parallel", "arbitrary")),
        cost_estimate=cost,
    )(xp, wmu_p, wrho_p, weps_p, bmu_p, brho_p, beps_p)

    log_q = jnp.sum(logq_tiles)   # non-hot tile entries are exactly 0
    log_p = jnp.sum(logp_tiles)
    kl = log_q - log_p
    return y_p[:B, :Out], log_q, log_p, kl


# ---- pure-JAX reference (mirrors the torch module exactly) ---------------------
def _log_gaussian_mixedprior_ref(x, sigma_wide=1.0, sigma_narrow=0.002, frac=0.5):
    expr_wide = frac * jnp.exp(-0.5 * jnp.square(x) / (sigma_wide * sigma_wide)) / sigma_wide
    expr_narrow = (1.0 - frac) * jnp.exp(
        -0.5 * jnp.square(x) / (sigma_narrow * sigma_narrow)) / sigma_wide
    return jnp.log(expr_wide + expr_narrow)


def _log_gaussian_posterior_ref(x, mu, sigma):
    return -0.5 * jnp.square(x - mu) / jnp.square(sigma) - jnp.log(sigma)


def _reference(x, w_mu, w_rho, w_eps, b_mu, b_rho, b_eps):
    w_sigma = jnp.log(1.0 + jnp.exp(w_rho))
    weight = w_mu + w_sigma * w_eps
    b_sigma = jnp.log(1.0 + jnp.exp(b_rho))
    bias = b_mu + b_sigma * b_eps
    log_q = (jnp.sum(_log_gaussian_posterior_ref(weight, w_mu, w_sigma))
             + jnp.sum(_log_gaussian_posterior_ref(bias, b_mu, b_sigma)))
    log_p = (jnp.sum(_log_gaussian_mixedprior_ref(weight))
             + jnp.sum(_log_gaussian_mixedprior_ref(bias)))
    y = x @ weight.T + bias
    return y, log_q, log_p, log_q - log_p


if __name__ == "__main__":
    batch, in_features, out_features = 8, 32, 16

    key = jax.random.PRNGKey(0)
    k_x, k_wmu, k_bmu, k_weps, k_beps = jax.random.split(key, 5)

    # Deterministic parameter init, mirroring reset_parameters():
    stdv = 1.0 / np.sqrt(in_features)
    w_mu = jax.random.uniform(k_wmu, (out_features, in_features),
                              minval=-stdv, maxval=stdv, dtype=jnp.float32)
    w_rho = jnp.full((out_features, in_features), -3.0, dtype=jnp.float32)
    b_mu = jax.random.uniform(k_bmu, (out_features,),
                              minval=-stdv, maxval=stdv, dtype=jnp.float32)
    b_rho = jnp.full((out_features,), -3.0, dtype=jnp.float32)

    # Noise (stands in for torch.normal(mean=0, std=ones)):
    w_eps = jax.random.normal(k_weps, (out_features, in_features), dtype=jnp.float32)
    b_eps = jax.random.normal(k_beps, (out_features,), dtype=jnp.float32)

    x = jax.random.normal(k_x, (batch, in_features), dtype=jnp.float32)

    y, log_q, log_p, kl = bayes_linear_forward(x, w_mu, w_rho, w_eps, b_mu, b_rho, b_eps)
    jax.block_until_ready((y, log_q, log_p, kl))

    y_ref, lq_ref, lp_ref, kl_ref = _reference(x, w_mu, w_rho, w_eps, b_mu, b_rho, b_eps)
    np.testing.assert_allclose(np.asarray(y), np.asarray(y_ref), rtol=2e-2, atol=2e-2)
    np.testing.assert_allclose(float(log_q), float(lq_ref), rtol=1e-3, atol=1e-2)
    np.testing.assert_allclose(float(log_p), float(lp_ref), rtol=1e-3, atol=1e-2)
    np.testing.assert_allclose(float(kl), float(kl_ref), rtol=1e-3, atol=1e-2)

    print("KERNEL_OK")
</pallas_src>

<mosaic_0001>
module attributes {stable_mosaic.version = 11 : i64} {
  func.func @_bayes_linear_kernel(%arg0: i32, %arg1: i32, %arg2: memref<8x128xf32, #tpu.memory_space<vmem>>, %arg3: memref<128x128xf32, #tpu.memory_space<vmem>>, %arg4: memref<128x128xf32, #tpu.memory_space<vmem>>, %arg5: memref<128x128xf32, #tpu.memory_space<vmem>>, %arg6: memref<1x128xf32, #tpu.memory_space<vmem>>, %arg7: memref<1x128xf32, #tpu.memory_space<vmem>>, %arg8: memref<1x128xf32, #tpu.memory_space<vmem>>, %arg9: memref<8x128xf32, #tpu.memory_space<vmem>>, %arg10: memref<8x128xf32, #tpu.memory_space<vmem>>, %arg11: memref<8x128xf32, #tpu.memory_space<vmem>>, %arg12: memref<8x128xf32, #tpu.memory_space<vmem>>) attributes {dimension_semantics = [#tpu.dimension_semantics<parallel>, #tpu.dimension_semantics<arbitrary>], iteration_bounds = array<i64: 1, 1>, scalar_prefetch = 0 : i64, scratch_operands = 1 : i64, tpu.core_type = #tpu.core_type<tc>, window_params = [{transform_indices = @transform_0, window_bounds = array<i64: 8, 128>}, {transform_indices = @transform_1, window_bounds = array<i64: 128, 128>}, {transform_indices = @transform_2, window_bounds = array<i64: 128, 128>}, {transform_indices = @transform_3, window_bounds = array<i64: 128, 128>}, {transform_indices = @transform_4, window_bounds = array<i64: 1, 128>}, {transform_indices = @transform_5, window_bounds = array<i64: 1, 128>}, {transform_indices = @transform_6, window_bounds = array<i64: 1, 128>}, {transform_indices = @transform_7, window_bounds = array<i64: 8, 128>}, {transform_indices = @transform_8, window_bounds = array<i64: 8, 128>}, {transform_indices = @transform_9, window_bounds = array<i64: 8, 128>}]} {
    %c0 = arith.constant 0 : index
    %c0_0 = arith.constant 0 : index
    %0 = vector.load %arg3[%c0, %c0_0] : memref<128x128xf32, #tpu.memory_space<vmem>>, vector<128x128xf32>
    %c0_1 = arith.constant 0 : index
    %c0_2 = arith.constant 0 : index
    %1 = vector.load %arg4[%c0_1, %c0_2] : memref<128x128xf32, #tpu.memory_space<vmem>>, vector<128x128xf32>
    %c0_3 = arith.constant 0 : index
    %c0_4 = arith.constant 0 : index
    %2 = vector.load %arg5[%c0_3, %c0_4] : memref<128x128xf32, #tpu.memory_space<vmem>>, vector<128x128xf32>
    %3 = math.exp %1 : vector<128x128xf32>
    %cst = arith.constant 1.000000e+00 : f32
    %4 = vector.broadcast %cst : f32 to vector<128x128xf32>
    %5 = arith.addf %4, %3 : vector<128x128xf32>
    %6 = math.log %5 : vector<128x128xf32>
    %7 = arith.mulf %6, %2 : vector<128x128xf32>
    %8 = arith.addf %0, %7 : vector<128x128xf32>
    %c0_5 = arith.constant 0 : index
    %c0_6 = arith.constant 0 : index
    %9 = vector.load %arg6[%c0_5, %c0_6] : memref<1x128xf32, #tpu.memory_space<vmem>>, vector<1x128xf32>
    %c0_7 = arith.constant 0 : index
    %c0_8 = arith.constant 0 : index
    %10 = vector.load %arg7[%c0_7, %c0_8] : memref<1x128xf32, #tpu.memory_space<vmem>>, vector<1x128xf32>
    %c0_9 = arith.constant 0 : index
    %c0_10 = arith.constant 0 : index
    %11 = vector.load %arg8[%c0_9, %c0_10] : memref<1x128xf32, #tpu.memory_space<vmem>>, vector<1x128xf32>
    %12 = math.exp %10 : vector<1x128xf32>
    %cst_11 = arith.constant 1.000000e+00 : f32
    %13 = vector.broadcast %cst_11 : f32 to vector<1x128xf32>
    %14 = arith.addf %13, %12 : vector<1x128xf32>
    %15 = math.log %14 : vector<1x128xf32>
    %16 = arith.mulf %15, %11 : vector<1x128xf32>
    %17 = arith.addf %9, %16 : vector<1x128xf32>
    %18 = tpu.iota {dimensions = array<i32: 0>} : vector<128x128xi32>
    %c128_i32 = arith.constant 128 : i32
    %19 = arith.muli %arg0, %c128_i32 : i32
    %20 = vector.broadcast %19 : i32 to vector<128x128xi32>
    %21 = arith.addi %18, %20 : vector<128x128xi32>
    %22 = tpu.iota {dimensions = array<i32: 1>} : vector<128x128xi32>
    %c128_i32_12 = arith.constant 128 : i32
    %23 = arith.muli %arg1, %c128_i32_12 : i32
    %24 = vector.broadcast %23 : i32 to vector<128x128xi32>
    %25 = arith.addi %22, %24 : vector<128x128xi32>
    %c16_i32 = arith.constant 16 : i32
    %26 = vector.broadcast %c16_i32 : i32 to vector<128x128xi32>
    %27 = arith.cmpi slt, %21, %26 : vector<128x128xi32>
    %c32_i32 = arith.constant 32 : i32
    %28 = vector.broadcast %c32_i32 : i32 to vector<128x128xi32>
    %29 = arith.cmpi slt, %25, %28 : vector<128x128xi32>
    %30 = arith.andi %27, %29 : vector<128x128xi1>
    %31 = tpu.iota {dimensions = array<i32: 1>} : vector<1x128xi32>
    %c128_i32_13 = arith.constant 128 : i32
    %32 = arith.muli %arg0, %c128_i32_13 : i32
    %33 = vector.broadcast %32 : i32 to vector<1x128xi32>
    %34 = arith.addi %31, %33 : vector<1x128xi32>
    %c16_i32_14 = arith.constant 16 : i32
    %35 = vector.broadcast %c16_i32_14 : i32 to vector<1x128xi32>
    %36 = arith.cmpi slt, %34, %35 : vector<1x128xi32>
    %37 = arith.mulf %2, %2 : vector<128x128xf32>
    %cst_15 = arith.constant -5.000000e-01 : f32
    %38 = vector.broadcast %cst_15 : f32 to vector<128x128xf32>
    %39 = arith.mulf %38, %37 : vector<128x128xf32>
    %40 = math.log %6 : vector<128x128xf32>
    %41 = arith.subf %39, %40 : vector<128x128xf32>
    %cst_16 = arith.constant 0.000000e+00 : f32
    %42 = vector.broadcast %cst_16 : f32 to vector<128x128xf32>
    %43 = arith.select %30, %41, %42 : vector<128x128xi1>, vector<128x128xf32>
    %44 = arith.mulf %8, %8 : vector<128x128xf32>
    %cst_17 = arith.constant -5.000000e-01 : f32
    %45 = vector.broadcast %cst_17 : f32 to vector<128x128xf32>
    %46 = arith.mulf %45, %44 : vector<128x128xf32>
    %47 = math.exp %46 : vector<128x128xf32>
    %cst_18 = arith.constant 5.000000e-01 : f32
    %48 = vector.broadcast %cst_18 : f32 to vector<128x128xf32>
    %49 = arith.mulf %48, %47 : vector<128x128xf32>
    %cst_19 = arith.constant -1.250000e+05 : f32
    %50 = vector.broadcast %cst_19 : f32 to vector<128x128xf32>
    %51 = arith.mulf %50, %44 : vector<128x128xf32>
    %52 = math.exp %51 : vector<128x128xf32>
    %cst_20 = arith.constant 5.000000e-01 : f32
    %53 = vector.broadcast %cst_20 : f32 to vector<128x128xf32>
    %54 = arith.mulf %53, %52 : vector<128x128xf32>
    %55 = arith.addf %49, %54 : vector<128x128xf32>
    %56 = math.log %55 : vector<128x128xf32>
    %cst_21 = arith.constant 0.000000e+00 : f32
    %57 = vector.broadcast %cst_21 : f32 to vector<128x128xf32>
    %58 = arith.select %30, %56, %57 : vector<128x128xi1>, vector<128x128xf32>
    %59 = vector.shape_cast %43 : vector<128x128xf32> to vector<1x128x128xf32>
    %cst_22 = arith.constant dense<0.000000e+00> : vector<1xf32>
    %60 = vector.multi_reduction <add>, %59, %cst_22 [1, 2] : vector<1x128x128xf32> to vector<1xf32>
    %61 = vector.shape_cast %60 : vector<1xf32> to vector<1x1x1xf32>
    %62 = vector.extract %61[0, 0, 0] : f32 from vector<1x1x1xf32>
    %63 = vector.shape_cast %58 : vector<128x128xf32> to vector<1x128x128xf32>
    %cst_23 = arith.constant dense<0.000000e+00> : vector<1xf32>
    %64 = vector.multi_reduction <add>, %63, %cst_23 [1, 2] : vector<1x128x128xf32> to vector<1xf32>
    %65 = vector.shape_cast %64 : vector<1xf32> to vector<1x1x1xf32>
    %66 = vector.extract %65[0, 0, 0] : f32 from vector<1x1x1xf32>
    %67 = arith.mulf %11, %11 : vector<1x128xf32>
    %cst_24 = arith.constant -5.000000e-01 : f32
    %68 = vector.broadcast %cst_24 : f32 to vector<1x128xf32>
    %69 = arith.mulf %68, %67 : vector<1x128xf32>
    %70 = math.log %15 : vector<1x128xf32>
    %71 = arith.subf %69, %70 : vector<1x128xf32>
    %cst_25 = arith.constant 0.000000e+00 : f32
    %72 = vector.broadcast %cst_25 : f32 to vector<1x128xf32>
    %73 = arith.select %36, %71, %72 : vector<1x128xi1>, vector<1x128xf32>
    %74 = arith.mulf %17, %17 : vector<1x128xf32>
    %cst_26 = arith.constant -5.000000e-01 : f32
    %75 = vector.broadcast %cst_26 : f32 to vector<1x128xf32>
    %76 = arith.mulf %75, %74 : vector<1x128xf32>
    %77 = math.exp %76 : vector<1x128xf32>
    %cst_27 = arith.constant 5.000000e-01 : f32
    %78 = vector.broadcast %cst_27 : f32 to vector<1x128xf32>
    %79 = arith.mulf %78, %77 : vector<1x128xf32>
    %cst_28 = arith.constant -1.250000e+05 : f32
    %80 = vector.broadcast %cst_28 : f32 to vector<1x128xf32>
    %81 = arith.mulf %80, %74 : vector<1x128xf32>
    %82 = math.exp %81 : vector<1x128xf32>
    %cst_29 = arith.constant 5.000000e-01 : f32
    %83 = vector.broadcast %cst_29 : f32 to vector<1x128xf32>
    %84 = arith.mulf %83, %82 : vector<1x128xf32>
    %85 = arith.addf %79, %84 : vector<1x128xf32>
    %86 = math.log %85 : vector<1x128xf32>
    %cst_30 = arith.constant 0.000000e+00 : f32
    %87 = vector.broadcast %cst_30 : f32 to vector<1x128xf32>
    %88 = arith.select %36, %86, %87 : vector<1x128xi1>, vector<1x128xf32>
    %c0_i32 = arith.constant 0 : i32
    %89 = arith.cmpi eq, %arg1, %c0_i32 : i32
    %90 = arith.extui %89 : i1 to i32
    %91 = arith.sitofp %90 : i32 to f32
    %92 = vector.shape_cast %73 : vector<1x128xf32> to vector<1x1x128xf32>
    %cst_31 = arith.constant dense<0.000000e+00> : vector<1xf32>
    %93 = vector.multi_reduction <add>, %92, %cst_31 [1, 2] : vector<1x1x128xf32> to vector<1xf32>
    %94 = vector.shape_cast %93 : vector<1xf32> to vector<1x1x1xf32>
    %95 = vector.extract %94[0, 0, 0] : f32 from vector<1x1x1xf32>
    %96 = arith.mulf %91, %95 : f32
    %97 = arith.addf %62, %96 : f32
    %98 = vector.shape_cast %88 : vector<1x128xf32> to vector<1x1x128xf32>
    %cst_32 = arith.constant dense<0.000000e+00> : vector<1xf32>
    %99 = vector.multi_reduction <add>, %98, %cst_32 [1, 2] : vector<1x1x128xf32> to vector<1xf32>
    %100 = vector.shape_cast %99 : vector<1xf32> to vector<1x1x1xf32>
    %101 = vector.extract %100[0, 0, 0] : f32 from vector<1x1x1xf32>
    %102 = arith.mulf %91, %101 : f32
    %103 = arith.addf %66, %102 : f32
    %104 = tpu.iota {dimensions = array<i32: 0>} : vector<8x128xi32>
    %c0_i32_33 = arith.constant 0 : i32
    %105 = vector.broadcast %c0_i32_33 : i32 to vector<8x128xi32>
    %106 = arith.cmpi eq, %104, %105 : vector<8x128xi32>
    %107 = tpu.iota {dimensions = array<i32: 1>} : vector<8x128xi32>
    %c0_i32_34 = arith.constant 0 : i32
    %108 = vector.broadcast %c0_i32_34 : i32 to vector<8x128xi32>
    %109 = arith.cmpi eq, %107, %108 : vector<8x128xi32>
    %110 = arith.andi %106, %109 : vector<8x128xi1>
    %cst_35 = arith.constant 0.000000e+00 : f32
    %111 = vector.broadcast %97 : f32 to vector<8x128xf32>
    %112 = vector.broadcast %cst_35 : f32 to vector<8x128xf32>
    %113 = arith.select %110, %111, %112 : vector<8x128xi1>, vector<8x128xf32>
    %c0_36 = arith.constant 0 : index
    %c0_37 = arith.constant 0 : index
    %114 = vector.load %arg10[%c0_36, %c0_37] : memref<8x128xf32, #tpu.memory_space<vmem>>, vector<8x128xf32>
    tpu.vector_store %arg10[%c0_36, %c0_37], %113 {strides = array<i32>} : memref<8x128xf32, #tpu.memory_space<vmem>>, vector<8x128xf32>,
    %cst_38 = arith.constant 0.000000e+00 : f32
    %115 = vector.broadcast %103 : f32 to vector<8x128xf32>
    %116 = vector.broadcast %cst_38 : f32 to vector<8x128xf32>
    %117 = arith.select %110, %115, %116 : vector<8x128xi1>, vector<8x128xf32>
    %c0_39 = arith.constant 0 : index
    %c0_40 = arith.constant 0 : index
    %118 = vector.load %arg11[%c0_39, %c0_40] : memref<8x128xf32, #tpu.memory_space<vmem>>, vector<8x128xf32>
    tpu.vector_store %arg11[%c0_39, %c0_40], %117 {strides = array<i32>} : memref<8x128xf32, #tpu.memory_space<vmem>>, vector<8x128xf32>,
    %c0_i32_41 = arith.constant 0 : i32
    %119 = arith.cmpi eq, %arg1, %c0_i32_41 : i32
    %120 = arith.extui %119 : i1 to i32
    %c0_i32_42 = arith.constant 0 : i32
    %121 = arith.cmpi ne, %120, %c0_i32_42 : i32
    scf.if %121 {
      %cst_54 = arith.constant 0.000000e+00 : f32
      %133 = vector.broadcast %cst_54 : f32 to vector<8x128xf32>
      %c0_55 = arith.constant 0 : index
      %c0_56 = arith.constant 0 : index
      %134 = vector.load %arg12[%c0_55, %c0_56] : memref<8x128xf32, #tpu.memory_space<vmem>>, vector<8x128xf32>
      tpu.vector_store %arg12[%c0_55, %c0_56], %133 {strides = array<i32>} : memref<8x128xf32, #tpu.memory_space<vmem>>, vector<8x128xf32>,
    } else {
    }
    %c0_43 = arith.constant 0 : index
    %c0_44 = arith.constant 0 : index
    %122 = vector.load %arg12[%c0_43, %c0_44] : memref<8x128xf32, #tpu.memory_space<vmem>>, vector<8x128xf32>
    %c0_45 = arith.constant 0 : index
    %c0_46 = arith.constant 0 : index
    %123 = vector.load %arg2[%c0_45, %c0_46] : memref<8x128xf32, #tpu.memory_space<vmem>>, vector<8x128xf32>
    %124 = arith.truncf %123 : vector<8x128xf32> to vector<8x128xbf16>
    %125 = arith.truncf %8 : vector<128x128xf32> to vector<128x128xbf16>
    %cst_47 = arith.constant dense<0.000000e+00> : vector<8x128xf32>
    %126 = tpu.matmul %124, %125, %cst_47 {dimension_numbers = #tpu.dot_dimension_numbers<[1], [1], [0], [0], [0, 0, 1, 0], [], []>} : vector<8x128xbf16>, vector<128x128xbf16>, vector<8x128xf32> -> vector<8x128xf32>
    %127 = arith.addf %122, %126 : vector<8x128xf32>
    %c0_48 = arith.constant 0 : index
    %c0_49 = arith.constant 0 : index
    %128 = vector.load %arg12[%c0_48, %c0_49] : memref<8x128xf32, #tpu.memory_space<vmem>>, vector<8x128xf32>
    tpu.vector_store %arg12[%c0_48, %c0_49], %127 {strides = array<i32>} : memref<8x128xf32, #tpu.memory_space<vmem>>, vector<8x128xf32>,
    %c0_50 = arith.constant 0 : index
    %c0_51 = arith.constant 0 : index
    %129 = vector.load %arg12[%c0_50, %c0_51] : memref<8x128xf32, #tpu.memory_space<vmem>>, vector<8x128xf32>
    %130 = vector.broadcast %17 : vector<1x128xf32> to vector<8x128xf32>
    %131 = arith.addf %129, %130 : vector<8x128xf32>
    %c0_52 = arith.constant 0 : index
    %c0_53 = arith.constant 0 : index
    %132 = vector.load %arg9[%c0_52, %c0_53] : memref<8x128xf32, #tpu.memory_space<vmem>>, vector<8x128xf32>
    tpu.vector_store %arg9[%c0_52, %c0_53], %131 {strides = array<i32>} : memref<8x128xf32, #tpu.memory_space<vmem>>, vector<8x128xf32>,
    return
  }
  func.func @transform_0(%arg0: i32, %arg1: i32) -> (i32, i32) {
    %c0_i32 = arith.constant 0 : i32
    %c0_i32_0 = arith.constant 0 : i32
    return %c0_i32, %arg1 : i32, i32
  }
  func.func @transform_1(%arg0: i32, %arg1: i32) -> (i32, i32) {
    %c0_i32 = arith.constant 0 : i32
    return %arg0, %arg1 : i32, i32
  }
  func.func @transform_2(%arg0: i32, %arg1: i32) -> (i32, i32) {
    %c0_i32 = arith.constant 0 : i32
    return %arg0, %arg1 : i32, i32
  }
  func.func @transform_3(%arg0: i32, %arg1: i32) -> (i32, i32) {
    %c0_i32 = arith.constant 0 : i32
    return %arg0, %arg1 : i32, i32
  }
  func.func @transform_4(%arg0: i32, %arg1: i32) -> (i32, i32) {
    %c0_i32 = arith.constant 0 : i32
    %c0_i32_0 = arith.constant 0 : i32
    return %c0_i32, %arg0 : i32, i32
  }
  func.func @transform_5(%arg0: i32, %arg1: i32) -> (i32, i32) {
    %c0_i32 = arith.constant 0 : i32
    %c0_i32_0 = arith.constant 0 : i32
    return %c0_i32, %arg0 : i32, i32
  }
  func.func @transform_6(%arg0: i32, %arg1: i32) -> (i32, i32) {
    %c0_i32 = arith.constant 0 : i32
    %c0_i32_0 = arith.constant 0 : i32
    return %c0_i32, %arg0 : i32, i32
  }
  func.func @transform_7(%arg0: i32, %arg1: i32) -> (i32, i32) {
    %c0_i32 = arith.constant 0 : i32
    %c0_i32_0 = arith.constant 0 : i32
    return %c0_i32, %arg0 : i32, i32
  }
  func.func @transform_8(%arg0: i32, %arg1: i32) -> (i32, i32) {
    %c0_i32 = arith.constant 0 : i32
    return %arg0, %arg1 : i32, i32
  }
  func.func @transform_9(%arg0: i32, %arg1: i32) -> (i32, i32) {
    %c0_i32 = arith.constant 0 : i32
    return %arg0, %arg1 : i32, i32
  }
}

</mosaic_0001>

<llo_original>
// kernel: tpu_custom_call.1
$region0: #{tpu_custom_call.1}
  #allocation0 [shape = 'u32[]', space=smem, size = 0x4, offset = 0x4, fixed_abs, tag = 'smem constant byte address 0x4 - core index']
  #allocation1 [shape = 'u32[144,128]{1,0:T(1,128)}', space=vmem, size = 0x12000, scoped, tag = 'internal scratch']
  #allocation2 [shape = 'f32[8,128]{1,0:T(8,128)}', space=vmem, size = 0x1000, scoped, tag = 'scratch operand']
  %s0 = inlined_call_operand.hbm [shape: f32[8,128], index: 0, kind: input, shape index: {}]
  %s1 = inlined_call_operand.hbm [shape: f32[128,128], index: 1, kind: input, shape index: {}]
  %s2 = inlined_call_operand.hbm [shape: f32[128,128], index: 2, kind: input, shape index: {}]
  %s3 = inlined_call_operand.hbm [shape: f32[128,128], index: 3, kind: input, shape index: {}]
  %s4 = inlined_call_operand.vmem [shape: f32[1,128], index: 4, kind: input, shape index: {}]
  %s5 = inlined_call_operand.vmem [shape: f32[1,128], index: 5, kind: input, shape index: {}]
  %s6 = inlined_call_operand.vmem [shape: f32[1,128], index: 6, kind: input, shape index: {}]
  %s7 = inlined_call_operand.hbm [shape: f32[8,128], index: 7, kind: output, shape index: {0}]
  %s8 = inlined_call_operand.hbm [shape: f32[8,128], index: 8, kind: output, shape index: {1}]
  %s9 = inlined_call_operand.hbm [shape: f32[8,128], index: 9, kind: output, shape index: {2}]
  %10 = xla_tuple %s7, %s8, %s9
  %s11 = sld [smem:[#allocation0]]
  $region74: #{tpu_custom_call.1} parent=0
    _
  %s13 = ssub.s32 1, %s11
  %s14 = scalar_select 0, %s13, %s11
  $region1: #{tpu_custom_call.1} parent=0
    #allocation3 [shape = 'u8[4096]{0}', space=vmem, size = 0x1000, scoped, tag = 'input window, operand 0, single buffered']
    #allocation4 [shape = 's32[1]{0}', space=sflag, size = 0x4, scoped, tag = 'scoped memory for tpu_custom_call.1']
    #allocation5 [shape = 's32[1]{0}', space=sflag, size = 0x4, scoped, tag = 'scoped memory for tpu_custom_call.1']
    #allocation6 [shape = 'u8[65536]{0}', space=vmem, size = 0x10000, scoped, tag = 'input window, operand 1, single buffered']
    #allocation7 [shape = 's32[1]{0}', space=sflag, size = 0x4, scoped, tag = 'scoped memory for tpu_custom_call.1']
    #allocation8 [shape = 'u8[65536]{0}', space=vmem, size = 0x10000, scoped, tag = 'input window, operand 2, single buffered']
    #allocation9 [shape = 'u8[65536]{0}', space=vmem, size = 0x10000, scoped, tag = 'input window, operand 3, single buffered']
    #allocation10 [shape = 's32[1]{0}', space=sflag, size = 0x4, scoped, tag = 'scoped memory for tpu_custom_call.1']
    #allocation11 [shape = 'u8[4096]{0}', space=vmem, size = 0x1000, scoped, tag = 'output window, operand 0, single buffered']
    #allocation12 [shape = 'u8[4096]{0}', space=vmem, size = 0x1000, scoped, tag = 'output window, operand 1, single buffered']
    #allocation13 [shape = 's32[1]{0}', space=sflag, size = 0x4, scoped, tag = 'scoped memory for tpu_custom_call.1']
    #allocation14 [shape = 'u8[4096]{0}', space=vmem, size = 0x1000, scoped, tag = 'output window, operand 2, single buffered']
    %15 = vsyncpa [#allocation4], 0
    %16 = vsyncpa [#allocation7], 0
    %17 = vsyncpa [#allocation10], 0
    %18 = vsyncpa [#allocation5], 0
    %19 = vsyncpa [#allocation13], 0
    // Predicated region
    $region2: #{tpu_custom_call.1} parent=1 // pred_check
      _
    $region3: #{tpu_custom_call.1} parent=1 // pred_check_branch
      %21 = sbr.rel (0) target = $region5
    $region4: #{tpu_custom_call.1} parent=1 // pred_region
      %s23 = ssub.s32 128, 128
      %24 = vsyncadd [#allocation4], %s23
      %s26 = sshll.u32 [#allocation3], 4
      %s27 = int_to_ptr.vmem [resolvable:$true] %s26
      %29 = dma.hbm_to_vmem [thread:$0]  %s0, 128, %s27, [#allocation4]
    $region5: #{tpu_custom_call.1} parent=1 // pred_fallthru
      _
    // Predicated region
    $region6: #{tpu_custom_call.1} parent=1 // pred_check
      _
    $region7: #{tpu_custom_call.1} parent=1 // pred_check_branch
      %31 = sbr.rel (0) target = $region9
    $region8: #{tpu_custom_call.1} parent=1 // pred_region
      %s33 = ssub.s32 2048, 2048
      %34 = vsyncadd [#allocation7], %s33
      %s35 = sshll.u32 [#allocation6], 4
      %s36 = int_to_ptr.vmem [resolvable:$true] %s35
      %41 = dma.hbm_to_vmem [thread:$0]  %s1, 2048, %s36, [#allocation7], 128, 128, 8
    $region9: #{tpu_custom_call.1} parent=1 // pred_fallthru
      _
    // Predicated region
    $region10: #{tpu_custom_call.1} parent=1 // pred_check
      _
    $region11: #{tpu_custom_call.1} parent=1 // pred_check_branch
      %43 = sbr.rel (0) target = $region13
    $region12: #{tpu_custom_call.1} parent=1 // pred_region
      %s45 = ssub.s32 2048, 2048
      %46 = vsyncadd [#allocation7], %s45
      %s47 = sshll.u32 [#allocation8], 4
      %s48 = int_to_ptr.vmem [resolvable:$true] %s47
      %53 = dma.hbm_to_vmem [thread:$0]  %s2, 2048, %s48, [#allocation7], 128, 128, 8
    $region13: #{tpu_custom_call.1} parent=1 // pred_fallthru
      _
    // Predicated region
    $region14: #{tpu_custom_call.1} parent=1 // pred_check
      _
    $region15: #{tpu_custom_call.1} parent=1 // pred_check_branch
      %55 = sbr.rel (0) target = $region17
    $region16: #{tpu_custom_call.1} parent=1 // pred_region
      %s57 = ssub.s32 2048, 2048
      %58 = vsyncadd [#allocation10], %s57
      %s59 = sshll.u32 [#allocation9], 4
      %s60 = int_to_ptr.vmem [resolvable:$true] %s59
      %65 = dma.hbm_to_vmem [thread:$0]  %s3, 2048, %s60, [#allocation10], 128, 128, 8
    $region17: #{tpu_custom_call.1} parent=1 // pred_fallthru
      _
    // Predicated region
    $region18: #{tpu_custom_call.1} parent=1 // pred_check
      _
    $region19: #{tpu_custom_call.1} parent=1 // pred_check_branch
      %67 = sbr.rel (0) target = $region21
    $region20: #{tpu_custom_call.1} parent=1 // pred_region
      _
    $region21: #{tpu_custom_call.1} parent=1 // pred_fallthru
      _
    // Predicated region
    $region22: #{tpu_custom_call.1} parent=1 // pred_check
      _
    $region23: #{tpu_custom_call.1} parent=1 // pred_check_branch
      %69 = sbr.rel (0) target = $region25
    $region24: #{tpu_custom_call.1} parent=1 // pred_region
      _
    $region25: #{tpu_custom_call.1} parent=1 // pred_fallthru
      _
    // Predicated region
    $region26: #{tpu_custom_call.1} parent=1 // pred_check
      _
    $region27: #{tpu_custom_call.1} parent=1 // pred_check_branch
      %71 = sbr.rel (0) target = $region29
    $region28: #{tpu_custom_call.1} parent=1 // pred_region
      _
    $region29: #{tpu_custom_call.1} parent=1 // pred_fallthru
      _
    // Predicated region
    $region30: #{tpu_custom_call.1} parent=1 // pred_check
      _
    $region31: #{tpu_custom_call.1} parent=1 // pred_check_branch
      %73 = sbr.rel (0) target = $region33
    $region32: #{tpu_custom_call.1} parent=1 // pred_region
      %74 = dma.done [#allocation4], 128
    $region33: #{tpu_custom_call.1} parent=1 // pred_fallthru
      _
    // Predicated region
    $region34: #{tpu_custom_call.1} parent=1 // pred_check
      _
    $region35: #{tpu_custom_call.1} parent=1 // pred_check_branch
      %76 = sbr.rel (0) target = $region37
    $region36: #{tpu_custom_call.1} parent=1 // pred_region
      %77 = dma.done [#allocation7], 2048
    $region37: #{tpu_custom_call.1} parent=1 // pred_fallthru
      _
    // Predicated region
    $region38: #{tpu_custom_call.1} parent=1 // pred_check
      _
    $region39: #{tpu_custom_call.1} parent=1 // pred_check_branch
      %79 = sbr.rel (0) target = $region41
    $region40: #{tpu_custom_call.1} parent=1 // pred_region
      %80 = dma.done [#allocation7], 2048
    $region41: #{tpu_custom_call.1} parent=1 // pred_fallthru
      _
    // Predicated region
    $region42: #{tpu_custom_call.1} parent=1 // pred_check
      _
    $region43: #{tpu_custom_call.1} parent=1 // pred_check_branch
      %82 = sbr.rel (0) target = $region45
    $region44: #{tpu_custom_call.1} parent=1 // pred_region
      %83 = dma.done [#allocation10], 2048
    $region45: #{tpu_custom_call.1} parent=1 // pred_fallthru
      _
    %v85 = vld [vmem:[#allocation6] sm:$0xff]
    %v86 = vld [vmem:[#allocation6 + $0x8] sm:$0xff]
    %v87 = vld [vmem:[#allocation6 + $0x10] sm:$0xff]
    %v88 = vld [vmem:[#allocation6 + $0x18] sm:$0xff]
    %v89 = vld [vmem:[#allocation6 + $0x20] sm:$0xff]
    %v90 = vld [vmem:[#allocation6 + $0x28] sm:$0xff]
    %v91 = vld [vmem:[#allocation6 + $0x30] sm:$0xff]
    %v92 = vld [vmem:[#allocation6 + $0x38] sm:$0xff]
    %v93 = vld [vmem:[#allocation6 + $0x40] sm:$0xff]
    %v94 = vld [vmem:[#allocation6 + $0x48] sm:$0xff]
    %v95 = vld [vmem:[#allocation6 + $0x50] sm:$0xff]
    %v96 = vld [vmem:[#allocation6 + $0x58] sm:$0xff]
    %v97 = vld [vmem:[#allocation6 + $0x60] sm:$0xff]
    %v98 = vld [vmem:[#allocation6 + $0x68] sm:$0xff]
    %v99 = vld [vmem:[#allocation6 + $0x70] sm:$0xff]
    %v100 = vld [vmem:[#allocation6 + $0x78] sm:$0xff]
    %v101 = vld [vmem:[#allocation8] sm:$0xff]
    %v102 = vld [vmem:[#allocation8 + $0x8] sm:$0xff]
    %v103 = vld [vmem:[#allocation8 + $0x10] sm:$0xff]
    %v104 = vld [vmem:[#allocation8 + $0x18] sm:$0xff]
    %v105 = vld [vmem:[#allocation8 + $0x20] sm:$0xff]
    %v106 = vld [vmem:[#allocation8 + $0x28] sm:$0xff]
    %v107 = vld [vmem:[#allocation8 + $0x30] sm:$0xff]
    %v108 = vld [vmem:[#allocation8 + $0x38] sm:$0xff]
    %v109 = vld [vmem:[#allocation8 + $0x40] sm:$0xff]
    %v110 = vld [vmem:[#allocation8 + $0x48] sm:$0xff]
    %v111 = vld [vmem:[#allocation8 + $0x50] sm:$0xff]
    %v112 = vld [vmem:[#allocation8 + $0x58] sm:$0xff]
    %v113 = vld [vmem:[#allocation8 + $0x60] sm:$0xff]
    %v114 = vld [vmem:[#allocation8 + $0x68] sm:$0xff]
    %v115 = vld [vmem:[#allocation8 + $0x70] sm:$0xff]
    %v116 = vld [vmem:[#allocation8 + $0x78] sm:$0xff]
    %v117 = vld [vmem:[#allocation9] sm:$0xff]
    %v118 = vld [vmem:[#allocation9 + $0x8] sm:$0xff]
    %v119 = vld [vmem:[#allocation9 + $0x10] sm:$0xff]
    %v120 = vld [vmem:[#allocation9 + $0x18] sm:$0xff]
    %v121 = vld [vmem:[#allocation9 + $0x20] sm:$0xff]
    %v122 = vld [vmem:[#allocation9 + $0x28] sm:$0xff]
    %v123 = vld [vmem:[#allocation9 + $0x30] sm:$0xff]
    %v124 = vld [vmem:[#allocation9 + $0x38] sm:$0xff]
    %v125 = vld [vmem:[#allocation9 + $0x40] sm:$0xff]
    %v126 = vld [vmem:[#allocation9 + $0x48] sm:$0xff]
    %v127 = vld [vmem:[#allocation9 + $0x50] sm:$0xff]
    %v128 = vld [vmem:[#allocation9 + $0x58] sm:$0xff]
    %v129 = vld [vmem:[#allocation9 + $0x60] sm:$0xff]
    %v130 = vld [vmem:[#allocation9 + $0x68] sm:$0xff]
    %v131 = vld [vmem:[#allocation9 + $0x70] sm:$0xff]
    %v132 = vld [vmem:[#allocation9 + $0x78] sm:$0xff]
    %v133 = vmul.f32 %v101, 1.442695
    %v134 = vpow.pop %v133
    %v135 = vmul.f32 %v102, 1.442695
    %v136 = vpow.pop %v135
    %v137 = vmul.f32 %v103, 1.442695
    %v138 = vpow.pop %v137
    %v139 = vmul.f32 %v104, 1.442695
    %v140 = vpow.pop %v139
    %v141 = vmul.f32 %v105, 1.442695
    %v142 = vpow.pop %v141
    %v143 = vmul.f32 %v106, 1.442695
    %v144 = vpow.pop %v143
    %v145 = vmul.f32 %v107, 1.442695
    %v146 = vpow.pop %v145
    %v147 = vmul.f32 %v108, 1.442695
    %v148 = vpow.pop %v147
    %v149 = vmul.f32 %v109, 1.442695
    %v150 = vpow.pop %v149
    %v151 = vmul.f32 %v110, 1.442695
    %v152 = vpow.pop %v151
    %v153 = vmul.f32 %v111, 1.442695
    %v154 = vpow.pop %v153
    %v155 = vmul.f32 %v112, 1.442695
    %v156 = vpow.pop %v155
    %v157 = vmul.f32 %v113, 1.442695
    %v158 = vpow.pop %v157
    %v159 = vmul.f32 %v114, 1.442695
    %v160 = vpow.pop %v159
    %v161 = vmul.f32 %v115, 1.442695
    %v162 = vpow.pop %v161
    %v163 = vmul.f32 %v116, 1.442695
    %v164 = vpow.pop %v163
    %v165 = vadd.f32 %v134, 1.0
    %v166 = vadd.f32 %v136, 1.0
    %v167 = vadd.f32 %v138, 1.0
    %v168 = vadd.f32 %v140, 1.0
    %v169 = vadd.f32 %v142, 1.0
    %v170 = vadd.f32 %v144, 1.0
    %v171 = vadd.f32 %v146, 1.0
    %v172 = vadd.f32 %v148, 1.0
    %v173 = vadd.f32 %v150, 1.0
    %v174 = vadd.f32 %v152, 1.0
    %v175 = vadd.f32 %v154, 1.0
    %v176 = vadd.f32 %v156, 1.0
    %v177 = vadd.f32 %v158, 1.0
    %v178 = vadd.f32 %v160, 1.0
    %v179 = vadd.f32 %v162, 1.0
    %v180 = vadd.f32 %v164, 1.0
    %v181 = vlog2.pop %v165
    %v182 = vmul.f32 %v181, 0.6931472
    %v183 = vlog2.pop %v166
    %v184 = vmul.f32 %v183, 0.6931472
    %v185 = vlog2.pop %v167
    %v186 = vmul.f32 %v185, 0.6931472
    %v187 = vlog2.pop %v168
    %v188 = vmul.f32 %v187, 0.6931472
    %v189 = vlog2.pop %v169
    %v190 = vmul.f32 %v189, 0.6931472
    %v191 = vlog2.pop %v170
    %v192 = vmul.f32 %v191, 0.6931472
    %v193 = vlog2.pop %v171
    %v194 = vmul.f32 %v193, 0.6931472
    %v195 = vlog2.pop %v172
    %v196 = vmul.f32 %v195, 0.6931472
    %v197 = vlog2.pop %v173
    %v198 = vmul.f32 %v197, 0.6931472
    %v199 = vlog2.pop %v174
    %v200 = vmul.f32 %v199, 0.6931472
    %v201 = vlog2.pop %v175
    %v202 = vmul.f32 %v201, 0.6931472
    %v203 = vlog2.pop %v176
    %v204 = vmul.f32 %v203, 0.6931472
    %v205 = vlog2.pop %v177
    %v206 = vmul.f32 %v205, 0.6931472
    %v207 = vlog2.pop %v178
    %v208 = vmul.f32 %v207, 0.6931472
    %v209 = vlog2.pop %v179
    %v210 = vmul.f32 %v209, 0.6931472
    %v211 = vlog2.pop %v180
    %v212 = vmul.f32 %v211, 0.6931472
    %v213 = vmul.f32 %v182, %v117
    %v214 = vmul.f32 %v184, %v118
    %v215 = vmul.f32 %v186, %v119
    %v216 = vmul.f32 %v188, %v120
    %v217 = vmul.f32 %v190, %v121
    %v218 = vmul.f32 %v192, %v122
    %v219 = vmul.f32 %v194, %v123
    %v220 = vmul.f32 %v196, %v124
    %v221 = vmul.f32 %v198, %v125
    %v222 = vmul.f32 %v200, %v126
    %v223 = vmul.f32 %v202, %v127
    %v224 = vmul.f32 %v204, %v128
    %v225 = vmul.f32 %v206, %v129
    %v226 = vmul.f32 %v208, %v130
    %v227 = vmul.f32 %v210, %v131
    %v228 = vmul.f32 %v212, %v132
    %v229 = vadd.f32 %v85, %v213
    %v230 = vadd.f32 %v86, %v214
    %v231 = vadd.f32 %v87, %v215
    %v232 = vadd.f32 %v88, %v216
    %v233 = vadd.f32 %v89, %v217
    %v234 = vadd.f32 %v90, %v218
    %v235 = vadd.f32 %v91, %v219
    %v236 = vadd.f32 %v92, %v220
    %v237 = vadd.f32 %v93, %v221
    %v238 = vadd.f32 %v94, %v222
    %v239 = vadd.f32 %v95, %v223
    %v240 = vadd.f32 %v96, %v224
    %v241 = vadd.f32 %v97, %v225
    %v242 = vadd.f32 %v98, %v226
    %v243 = vadd.f32 %v99, %v227
    %v244 = vadd.f32 %v100, %v228
    %v245 = vld [vmem:[%s4] sm:$0x1]
    %v246 = vld [vmem:[%s5] sm:$0x1]
    %v247 = vld [vmem:[%s6] sm:$0x1]
    %v248 = vmul.f32 %v246, 1.442695
    %v249 = vpow.pop %v248
    %v250 = vadd.f32 %v249, 1.0
    %v251 = vlog2.pop %v250
    %v252 = vmul.f32 %v251, 0.6931472
    %v253 = vmul.f32 %v252, %v247
    %v254 = vadd.f32 %v245, %v253
    %v255 = vlaneseq
    %v256 = vshrl.u32 %v255, 7
    %v257 = vadd.s32 %v256, 8
    %v258 = vadd.s32 %v256, 16
    %v259 = vadd.s32 %v256, 24
    %v260 = vadd.s32 %v256, 32
    %v261 = vadd.s32 %v256, 40
    %v262 = vadd.s32 %v256, 48
    %v263 = vadd.s32 %v256, 56
    %v264 = vadd.s32 %v256, 64
    %v265 = vadd.s32 %v256, 72
    %v266 = vadd.s32 %v256, 80
    %v267 = vadd.s32 %v256, 88
    %v268 = vadd.s32 %v256, 96
    %v269 = vadd.s32 %v256, 104
    %v270 = vadd.s32 %v256, 112
    %v271 = vadd.s32 %v256, 120
    %s272 = smul.u32 0, 128
    %v273 = vstv %s272
    %v274 = vadd.s32 %v256, %v273
    %v275 = vadd.s32 %v257, %v273
    %v276 = vadd.s32 %v258, %v273
    %v277 = vadd.s32 %v259, %v273
    %v278 = vadd.s32 %v260, %v273
    %v279 = vadd.s32 %v261, %v273
    %v280 = vadd.s32 %v262, %v273
    %v281 = vadd.s32 %v263, %v273
    %v282 = vadd.s32 %v264, %v273
    %v283 = vadd.s32 %v265, %v273
    %v284 = vadd.s32 %v266, %v273
    %v285 = vadd.s32 %v267, %v273
    %v286 = vadd.s32 %v268, %v273
    %v287 = vadd.s32 %v269, %v273
    %v288 = vadd.s32 %v270, %v273
    %v289 = vadd.s32 %v271, %v273
    %v290 = vlaneseq
    %v291 = vand.u32 %v290, 127
    %s292 = smul.u32 0, 128
    %v293 = vstv %s292
    %v294 = vadd.s32 %v291, %v293
    %vm295 = vcmp.lt.s32.totalorder %v274, 16
    %vm296 = vcmp.lt.s32.totalorder %v275, 16
    %vm297 = vcmp.lt.s32.totalorder %v276, 16
    %vm298 = vcmp.lt.s32.totalorder %v277, 16
    %vm299 = vcmp.lt.s32.totalorder %v278, 16
    %vm300 = vcmp.lt.s32.totalorder %v279, 16
    %vm301 = vcmp.lt.s32.totalorder %v280, 16
    %vm302 = vcmp.lt.s32.totalorder %v281, 16
    %vm303 = vcmp.lt.s32.totalorder %v282, 16
    %vm304 = vcmp.lt.s32.totalorder %v283, 16
    %vm305 = vcmp.lt.s32.totalorder %v284, 16
    %vm306 = vcmp.lt.s32.totalorder %v285, 16
    %vm307 = vcmp.lt.s32.totalorder %v286, 16
    %vm308 = vcmp.lt.s32.totalorder %v287, 16
    %vm309 = vcmp.lt.s32.totalorder %v288, 16
    %vm310 = vcmp.lt.s32.totalorder %v289, 16
    %vm311 = vcmp.lt.s32.totalorder %v294, 32
    %vm312 = vmand %vm295, %vm311
    %vm313 = vmand %vm296, %vm311
    %vm314 = vmand %vm297, %vm311
    %vm315 = vmand %vm298, %vm311
    %vm316 = vmand %vm299, %vm311
    %vm317 = vmand %vm300, %vm311
    %vm318 = vmand %vm301, %vm311
    %vm319 = vmand %vm302, %vm311
    %vm320 = vmand %vm303, %vm311
    %vm321 = vmand %vm304, %vm311
    %vm322 = vmand %vm305, %vm311
    %vm323 = vmand %vm306, %vm311
    %vm324 = vmand %vm307, %vm311
    %vm325 = vmand %vm308, %vm311
    %vm326 = vmand %vm309, %vm311
    %vm327 = vmand %vm310, %vm311
    %v328 = vadd.s32 %v291, %v273
    %vm329 = vcmp.lt.s32.totalorder %v328, 16
    %v330 = vmul.f32 %v117, %v117
    %v331 = vmul.f32 %v118, %v118
    %v332 = vmul.f32 %v119, %v119
    %v333 = vmul.f32 %v120, %v120
    %v334 = vmul.f32 %v121, %v121
    %v335 = vmul.f32 %v122, %v122
    %v336 = vmul.f32 %v123, %v123
    %v337 = vmul.f32 %v124, %v124
    %v338 = vmul.f32 %v125, %v125
    %v339 = vmul.f32 %v126, %v126
    %v340 = vmul.f32 %v127, %v127
    %v341 = vmul.f32 %v128, %v128
    %v342 = vmul.f32 %v129, %v129
    %v343 = vmul.f32 %v130, %v130
    %v344 = vmul.f32 %v131, %v131
    %v345 = vmul.f32 %v132, %v132
    %v346 = vmul.f32 %v330, -0.5
    %v347 = vmul.f32 %v331, -0.5
    %v348 = vmul.f32 %v332, -0.5
    %v349 = vmul.f32 %v333, -0.5
    %v350 = vmul.f32 %v334, -0.5
    %v351 = vmul.f32 %v335, -0.5
    %v352 = vmul.f32 %v336, -0.5
    %v353 = vmul.f32 %v337, -0.5
    %v354 = vmul.f32 %v338, -0.5
    %v355 = vmul.f32 %v339, -0.5
    %v356 = vmul.f32 %v340, -0.5
    %v357 = vmul.f32 %v341, -0.5
    %v358 = vmul.f32 %v342, -0.5
    %v359 = vmul.f32 %v343, -0.5
    %v360 = vmul.f32 %v344, -0.5
    %v361 = vmul.f32 %v345, -0.5
    %v362 = vlog2.pop %v182
    %v363 = vmul.f32 %v362, 0.6931472
    %v364 = vlog2.pop %v184
    %v365 = vmul.f32 %v364, 0.6931472
    %v366 = vlog2.pop %v186
    %v367 = vmul.f32 %v366, 0.6931472
    %v368 = vlog2.pop %v188
    %v369 = vmul.f32 %v368, 0.6931472
    %v370 = vlog2.pop %v190
    %v371 = vmul.f32 %v370, 0.6931472
    %v372 = vlog2.pop %v192
    %v373 = vmul.f32 %v372, 0.6931472
    %v374 = vlog2.pop %v194
    %v375 = vmul.f32 %v374, 0.6931472
    %v376 = vlog2.pop %v196
    %v377 = vmul.f32 %v376, 0.6931472
    %v378 = vlog2.pop %v198
    %v379 = vmul.f32 %v378, 0.6931472
    %v380 = vlog2.pop %v200
    %v381 = vmul.f32 %v380, 0.6931472
    %v382 = vlog2.pop %v202
    %v383 = vmul.f32 %v382, 0.6931472
    %v384 = vlog2.pop %v204
    %v385 = vmul.f32 %v384, 0.6931472
    %v386 = vlog2.pop %v206
    %v387 = vmul.f32 %v386, 0.6931472
    %v388 = vlog2.pop %v208
    %v389 = vmul.f32 %v388, 0.6931472
    %v390 = vlog2.pop %v210
    %v391 = vmul.f32 %v390, 0.6931472
    %v392 = vlog2.pop %v212
    %v393 = vmul.f32 %v392, 0.6931472
    %v394 = vsub.f32 %v346, %v363
    %v395 = vsub.f32 %v347, %v365
    %v396 = vsub.f32 %v348, %v367
    %v397 = vsub.f32 %v349, %v369
    %v398 = vsub.f32 %v350, %v371
    %v399 = vsub.f32 %v351, %v373
    %v400 = vsub.f32 %v352, %v375
    %v401 = vsub.f32 %v353, %v377
    %v402 = vsub.f32 %v354, %v379
    %v403 = vsub.f32 %v355, %v381
    %v404 = vsub.f32 %v356, %v383
    %v405 = vsub.f32 %v357, %v385
    %v406 = vsub.f32 %v358, %v387
    %v407 = vsub.f32 %v359, %v389
    %v408 = vsub.f32 %v360, %v391
    %v409 = vsub.f32 %v361, %v393
    %v410 = vsel %vm312, %v394, 0.0
    %v411 = vsel %vm313, %v395, 0.0
    %v412 = vsel %vm314, %v396, 0.0
    %v413 = vsel %vm315, %v397, 0.0
    %v414 = vsel %vm316, %v398, 0.0
    %v415 = vsel %vm317, %v399, 0.0
    %v416 = vsel %vm318, %v400, 0.0
    %v417 = vsel %vm319, %v401, 0.0
    %v418 = vsel %vm320, %v402, 0.0
    %v419 = vsel %vm321, %v403, 0.0
    %v420 = vsel %vm322, %v404, 0.0
    %v421 = vsel %vm323, %v405, 0.0
    %v422 = vsel %vm324, %v406, 0.0
    %v423 = vsel %vm325, %v407, 0.0
    %v424 = vsel %vm326, %v408, 0.0
    %v425 = vsel %vm327, %v409, 0.0
    %v426 = vmul.f32 %v229, %v229
    %v427 = vmul.f32 %v230, %v230
    %v428 = vmul.f32 %v231, %v231
    %v429 = vmul.f32 %v232, %v232
    %v430 = vmul.f32 %v233, %v233
    %v431 = vmul.f32 %v234, %v234
    %v432 = vmul.f32 %v235, %v235
    %v433 = vmul.f32 %v236, %v236
    %v434 = vmul.f32 %v237, %v237
    %v435 = vmul.f32 %v238, %v238
    %v436 = vmul.f32 %v239, %v239
    %v437 = vmul.f32 %v240, %v240
    %v438 = vmul.f32 %v241, %v241
    %v439 = vmul.f32 %v242, %v242
    %v440 = vmul.f32 %v243, %v243
    %v441 = vmul.f32 %v244, %v244
    %v442 = vmul.f32 %v426, -0.5
    %v443 = vmul.f32 %v427, -0.5
    %v444 = vmul.f32 %v428, -0.5
    %v445 = vmul.f32 %v429, -0.5
    %v446 = vmul.f32 %v430, -0.5
    %v447 = vmul.f32 %v431, -0.5
    %v448 = vmul.f32 %v432, -0.5
    %v449 = vmul.f32 %v433, -0.5
    %v450 = vmul.f32 %v434, -0.5
    %v451 = vmul.f32 %v435, -0.5
    %v452 = vmul.f32 %v436, -0.5
    %v453 = vmul.f32 %v437, -0.5
    %v454 = vmul.f32 %v438, -0.5
    %v455 = vmul.f32 %v439, -0.5
    %v456 = vmul.f32 %v440, -0.5
    %v457 = vmul.f32 %v441, -0.5
    %v458 = vmul.f32 %v442, 1.442695
    %v459 = vpow.pop %v458
    %v460 = vmul.f32 %v443, 1.442695
    %v461 = vpow.pop %v460
    %v462 = vmul.f32 %v444, 1.442695
    %v463 = vpow.pop %v462
    %v464 = vmul.f32 %v445, 1.442695
    %v465 = vpow.pop %v464
    %v466 = vmul.f32 %v446, 1.442695
    %v467 = vpow.pop %v466
    %v468 = vmul.f32 %v447, 1.442695
    %v469 = vpow.pop %v468
    %v470 = vmul.f32 %v448, 1.442695
    %v471 = vpow.pop %v470
    %v472 = vmul.f32 %v449, 1.442695
    %v473 = vpow.pop %v472
    %v474 = vmul.f32 %v450, 1.442695
    %v475 = vpow.pop %v474
    %v476 = vmul.f32 %v451, 1.442695
    %v477 = vpow.pop %v476
    %v478 = vmul.f32 %v452, 1.442695
    %v479 = vpow.pop %v478
    %v480 = vmul.f32 %v453, 1.442695
    %v481 = vpow.pop %v480
    %v482 = vmul.f32 %v454, 1.442695
    %v483 = vpow.pop %v482
    %v484 = vmul.f32 %v455, 1.442695
    %v485 = vpow.pop %v484
    %v486 = vmul.f32 %v456, 1.442695
    %v487 = vpow.pop %v486
    %v488 = vmul.f32 %v457, 1.442695
    %v489 = vpow.pop %v488
    %v490 = vmul.f32 %v459, 0.5
    %v491 = vmul.f32 %v461, 0.5
    %v492 = vmul.f32 %v463, 0.5
    %v493 = vmul.f32 %v465, 0.5
    %v494 = vmul.f32 %v467, 0.5
    %v495 = vmul.f32 %v469, 0.5
    %v496 = vmul.f32 %v471, 0.5
    %v497 = vmul.f32 %v473, 0.5
    %v498 = vmul.f32 %v475, 0.5
    %v499 = vmul.f32 %v477, 0.5
    %v500 = vmul.f32 %v479, 0.5
    %v501 = vmul.f32 %v481, 0.5
    %v502 = vmul.f32 %v483, 0.5
    %v503 = vmul.f32 %v485, 0.5
    %v504 = vmul.f32 %v487, 0.5
    %v505 = vmul.f32 %v489, 0.5
    %v506 = vmul.f32 %v426, -125000.0
    %v507 = vmul.f32 %v427, -125000.0
    %v508 = vmul.f32 %v428, -125000.0
    %v509 = vmul.f32 %v429, -125000.0
    %v510 = vmul.f32 %v430, -125000.0
    %v511 = vmul.f32 %v431, -125000.0
    %v512 = vmul.f32 %v432, -125000.0
    %v513 = vmul.f32 %v433, -125000.0
    %v514 = vmul.f32 %v434, -125000.0
    %v515 = vmul.f32 %v435, -125000.0
    %v516 = vmul.f32 %v436, -125000.0
    %v517 = vmul.f32 %v437, -125000.0
    %v518 = vmul.f32 %v438, -125000.0
    %v519 = vmul.f32 %v439, -125000.0
    %v520 = vmul.f32 %v440, -125000.0
    %v521 = vmul.f32 %v441, -125000.0
    %v522 = vmul.f32 %v506, 1.442695
    %v523 = vpow.pop %v522
    %v524 = vmul.f32 %v507, 1.442695
    %v525 = vpow.pop %v524
    %v526 = vmul.f32 %v508, 1.442695
    %v527 = vpow.pop %v526
    %v528 = vmul.f32 %v509, 1.442695
    %v529 = vpow.pop %v528
    %v530 = vmul.f32 %v510, 1.442695
    %v531 = vpow.pop %v530
    %v532 = vmul.f32 %v511, 1.442695
    %v533 = vpow.pop %v532
    %v534 = vmul.f32 %v512, 1.442695
    %v535 = vpow.pop %v534
    %v536 = vmul.f32 %v513, 1.442695
    %v537 = vpow.pop %v536
    %v538 = vmul.f32 %v514, 1.442695
    %v539 = vpow.pop %v538
    %v540 = vmul.f32 %v515, 1.442695
    %v541 = vpow.pop %v540
    %v542 = vmul.f32 %v516, 1.442695
    %v543 = vpow.pop %v542
    %v544 = vmul.f32 %v517, 1.442695
    %v545 = vpow.pop %v544
    %v546 = vmul.f32 %v518, 1.442695
    %v547 = vpow.pop %v546
    %v548 = vmul.f32 %v519, 1.442695
    %v549 = vpow.pop %v548
    %v550 = vmul.f32 %v520, 1.442695
    %v551 = vpow.pop %v550
    %v552 = vmul.f32 %v521, 1.442695
    %v553 = vpow.pop %v552
    %v554 = vmul.f32 %v523, 0.5
    %v555 = vmul.f32 %v525, 0.5
    %v556 = vmul.f32 %v527, 0.5
    %v557 = vmul.f32 %v529, 0.5
    %v558 = vmul.f32 %v531, 0.5
    %v559 = vmul.f32 %v533, 0.5
    %v560 = vmul.f32 %v535, 0.5
    %v561 = vmul.f32 %v537, 0.5
    %v562 = vmul.f32 %v539, 0.5
    %v563 = vmul.f32 %v541, 0.5
    %v564 = vmul.f32 %v543, 0.5
    %v565 = vmul.f32 %v545, 0.5
    %v566 = vmul.f32 %v547, 0.5
    %v567 = vmul.f32 %v549, 0.5
    %v568 = vmul.f32 %v551, 0.5
    %v569 = vmul.f32 %v553, 0.5
    %v570 = vadd.f32 %v490, %v554
    %v571 = vadd.f32 %v491, %v555
    %v572 = vadd.f32 %v492, %v556
    %v573 = vadd.f32 %v493, %v557
    %v574 = vadd.f32 %v494, %v558
    %v575 = vadd.f32 %v495, %v559
    %v576 = vadd.f32 %v496, %v560
    %v577 = vadd.f32 %v497, %v561
    %v578 = vadd.f32 %v498, %v562
    %v579 = vadd.f32 %v499, %v563
    %v580 = vadd.f32 %v500, %v564
    %v581 = vadd.f32 %v501, %v565
    %v582 = vadd.f32 %v502, %v566
    %v583 = vadd.f32 %v503, %v567
    %v584 = vadd.f32 %v504, %v568
    %v585 = vadd.f32 %v505, %v569
    %v586 = vlog2.pop %v570
    %v587 = vmul.f32 %v586, 0.6931472
    %v588 = vlog2.pop %v571
    %v589 = vmul.f32 %v588, 0.6931472
    %v590 = vlog2.pop %v572
    %v591 = vmul.f32 %v590, 0.6931472
    %v592 = vlog2.pop %v573
    %v593 = vmul.f32 %v592, 0.6931472
    %v594 = vlog2.pop %v574
    %v595 = vmul.f32 %v594, 0.6931472
    %v596 = vlog2.pop %v575
    %v597 = vmul.f32 %v596, 0.6931472
    %v598 = vlog2.pop %v576
    %v599 = vmul.f32 %v598, 0.6931472
    %v600 = vlog2.pop %v577
    %v601 = vmul.f32 %v600, 0.6931472
    %v602 = vlog2.pop %v578
    %v603 = vmul.f32 %v602, 0.6931472
    %v604 = vlog2.pop %v579
    %v605 = vmul.f32 %v604, 0.6931472
    %v606 = vlog2.pop %v580
    %v607 = vmul.f32 %v606, 0.6931472
    %v608 = vlog2.pop %v581
    %v609 = vmul.f32 %v608, 0.6931472
    %v610 = vlog2.pop %v582
    %v611 = vmul.f32 %v610, 0.6931472
    %v612 = vlog2.pop %v583
    %v613 = vmul.f32 %v612, 0.6931472
    %v614 = vlog2.pop %v584
    %v615 = vmul.f32 %v614, 0.6931472
    %v616 = vlog2.pop %v585
    %v617 = vmul.f32 %v616, 0.6931472
    %v618 = vsel %vm312, %v587, 0.0
    %v619 = vsel %vm313, %v589, 0.0
    %v620 = vsel %vm314, %v591, 0.0
    %v621 = vsel %vm315, %v593, 0.0
    %v622 = vsel %vm316, %v595, 0.0
    %v623 = vsel %vm317, %v597, 0.0
    %v624 = vsel %vm318, %v599, 0.0
    %v625 = vsel %vm319, %v601, 0.0
    %v626 = vsel %vm320, %v603, 0.0
    %v627 = vsel %vm321, %v605, 0.0
    %v628 = vsel %vm322, %v607, 0.0
    %v629 = vsel %vm323, %v609, 0.0
    %v630 = vsel %vm324, %v611, 0.0
    %v631 = vsel %vm325, %v613, 0.0
    %v632 = vsel %vm326, %v615, 0.0
    %v633 = vsel %vm327, %v617, 0.0
    %v634 = vadd.f32 %v410, %v411
    %v635 = vadd.f32 %v634, %v412
    %v636 = vadd.f32 %v635, %v413
    %v637 = vadd.f32 %v636, %v414
    %v638 = vadd.f32 %v637, %v415
    %v639 = vadd.f32 %v638, %v416
    %v640 = vadd.f32 %v639, %v417
    %v641 = vadd.f32 %v640, %v418
    %v642 = vadd.f32 %v641, %v419
    %v643 = vadd.f32 %v642, %v420
    %v644 = vadd.f32 %v643, %v421
    %v645 = vadd.f32 %v644, %v422
    %v646 = vadd.f32 %v645, %v423
    %v647 = vadd.f32 %v646, %v424
    %v648 = vadd.f32 %v647, %v425
    %649 = vadd.xlane.f32.xlu0 %v648
    %v650 = vpop.xlane.xlu0 %649
    %v651 = vrot.slane %v650, 4
    %v652 = vadd.f32 %v650, %v651
    %v653 = vrot.slane %v652, 2
    %v654 = vadd.f32 %v652, %v653
    %v655 = vrot.slane %v654, 1
    %v656 = vadd.f32 %v654, %v655
    %s657 = vtos %v656
    %v658 = vadd.f32 %v618, %v619
    %v659 = vadd.f32 %v658, %v620
    %v660 = vadd.f32 %v659, %v621
    %v661 = vadd.f32 %v660, %v622
    %v662 = vadd.f32 %v661, %v623
    %v663 = vadd.f32 %v662, %v624
    %v664 = vadd.f32 %v663, %v625
    %v665 = vadd.f32 %v664, %v626
    %v666 = vadd.f32 %v665, %v627
    %v667 = vadd.f32 %v666, %v628
    %v668 = vadd.f32 %v667, %v629
    %v669 = vadd.f32 %v668, %v630
    %v670 = vadd.f32 %v669, %v631
    %v671 = vadd.f32 %v670, %v632
    %v672 = vadd.f32 %v671, %v633
    %673 = vadd.xlane.f32.xlu0 %v672
    %v674 = vpop.xlane.xlu0 %673
    %v675 = vrot.slane %v674, 4
    %v676 = vadd.f32 %v674, %v675
    %v677 = vrot.slane %v676, 2
    %v678 = vadd.f32 %v676, %v677
    %v679 = vrot.slane %v678, 1
    %v680 = vadd.f32 %v678, %v679
    %s681 = vtos %v680
    %v682 = vmul.f32 %v247, %v247
    %v683 = vmul.f32 %v682, -0.5
    %v684 = vlog2.pop %v252
    %v685 = vmul.f32 %v684, 0.6931472
    %v686 = vsub.f32 %v683, %v685
    %v687 = vsel %vm329, %v686, 0.0
    %v688 = vmul.f32 %v254, %v254
    %v689 = vmul.f32 %v688, -0.5
    %v690 = vmul.f32 %v689, 1.442695
    %v691 = vpow.pop %v690
    %v692 = vmul.f32 %v691, 0.5
    %v693 = vmul.f32 %v688, -125000.0
    %v694 = vmul.f32 %v693, 1.442695
    %v695 = vpow.pop %v694
    %v696 = vmul.f32 %v695, 0.5
    %v697 = vadd.f32 %v692, %v696
    %v698 = vlog2.pop %v697
    %v699 = vmul.f32 %v698, 0.6931472
    %v700 = vsel %vm329, %v699, 0.0
    %p701 = scmp.eq.s32.totalorder 0, 0
    %s702 = scalar_select %p701, 1, 0
    %s703 = scvt.s32.f32 %s702
    %vm704 = vcmask 1040384
    %v705 = vsel %vm704, %v687, 0.0
    %706 = vadd.xlane.f32.xlu0 %v705
    %v707 = vpop.xlane.xlu0 %706
    %v708 = vrot.slane %v707, 4
    %v709 = vadd.f32 %v707, %v708
    %v710 = vrot.slane %v709, 2
    %v711 = vadd.f32 %v709, %v710
    %v712 = vrot.slane %v711, 1
    %v713 = vadd.f32 %v711, %v712
    %s714 = vtos %v713
    %s715 = smul.f32 %s703, %s714
    %s716 = sadd.f32 %s657, %s715
    %v717 = vsel %vm704, %v700, 0.0
    %718 = vadd.xlane.f32.xlu0 %v717
    %v719 = vpop.xlane.xlu0 %718
    %v720 = vrot.slane %v719, 4
    %v721 = vadd.f32 %v719, %v720
    %v722 = vrot.slane %v721, 2
    %v723 = vadd.f32 %v721, %v722
    %v724 = vrot.slane %v723, 1
    %v725 = vadd.f32 %v723, %v724
    %s726 = vtos %v725
    %s727 = smul.f32 %s703, %s726
    %s728 = sadd.f32 %s681, %s727
    %vm729 = vcmp.eq.s32.totalorder %v256, 0
    %vm730 = vcmp.eq.s32.totalorder %v291, 0
    %vm731 = vmand %vm729, %vm730
    %v732 = vstv %s716
    %v733 = vsel %vm731, %v732, 0.0
    %734 = vst [vmem:[#allocation12] sm:$0xff] %v733
    %v735 = vstv %s728
    %v736 = vsel %vm731, %v735, 0.0
    %737 = vst [vmem:[#allocation14] sm:$0xff] %v736
    // Predicated region
    $region46: #{tpu_custom_call.1} parent=1 // pred_check
      %p738 = pneg %p701
    $region47: #{tpu_custom_call.1} parent=1 // pred_check_branch
      %740 = sbr.rel (%p738) target = $region49
    $region48: #{tpu_custom_call.1} parent=1 // pred_region
      %741 = vst [vmem:[#allocation2] sm:$0xff] 0.0
    $region49: #{tpu_custom_call.1} parent=1 // pred_fallthru
      _
    %v742 = vld [vmem:[#allocation2] sm:$0xff]
    %v743 = vld [vmem:[#allocation3] sm:$0xff]
    %v744 = vpack.c.bf16 %v743, %v743
    %v745 = vpack.c.bf16 %v230, %v229
    %v746 = vpack.c.bf16 %v232, %v231
    %v747 = vpack.c.bf16 %v234, %v233
    %v748 = vpack.c.bf16 %v236, %v235
    %v749 = vpack.c.bf16 %v238, %v237
    %v750 = vpack.c.bf16 %v240, %v239
    %v751 = vpack.c.bf16 %v242, %v241
    %v752 = vpack.c.bf16 %v244, %v243
    %753 = vmatprep.subr.bf16.mxu0 0
    %754 = vmatpush1.bf16.xpose.msra.mxu0 %v745
    %755 = vmatprep.subr.bf16.mxu0 0
    %756 = vmatpush1.bf16.xpose.msra.mxu0 %v746
    %757 = vmatprep.subr.bf16.mxu0 0
    %758 = vmatpush1.bf16.xpose.msra.mxu0 %v747
    %759 = vmatprep.subr.bf16.mxu0 0
    %760 = vmatpush1.bf16.xpose.msra.mxu0 %v748
    %761 = vmatprep.subr.bf16.mxu0 0
    %762 = vmatpush1.bf16.xpose.msra.mxu0 %v749
    %763 = vmatprep.subr.bf16.mxu0 0
    %764 = vmatpush1.bf16.xpose.msra.mxu0 %v750
    %765 = vmatprep.subr.bf16.mxu0 0
    %766 = vmatpush1.bf16.xpose.msra.mxu0 %v751
    %767 = vmatprep.subr.bf16.mxu0 0
    %768 = vmatpush1.bf16.xpose.msra.mxu0 %v752
    %769 = vmatprep.subr.bf16.mxu0 0
    %770 = vmatpush1.bf16.xpose.msra.mxu0 0
    %771 = vmatprep.subr.bf16.mxu0 0
    %772 = vmatpush1.bf16.xpose.msra.mxu0 0
    %773 = vmatprep.subr.bf16.mxu0 0
    %774 = vmatpush1.bf16.xpose.msra.mxu0 0
    %775 = vmatprep.subr.bf16.mxu0 0
    %776 = vmatpush1.bf16.xpose.msra.mxu0 0
    %777 = vmatprep.subr.bf16.mxu0 0
    %778 = vmatpush1.bf16.xpose.msra.mxu0 0
    %779 = vmatprep.subr.bf16.mxu0 0
    %780 = vmatpush1.bf16.xpose.msra.mxu0 0
    %781 = vmatprep.subr.bf16.mxu0 0
    %782 = vmatpush1.bf16.xpose.msra.mxu0 0
    %783 = vmatprep.subr.bf16.mxu0 0
    %784 = vmatpush1.bf16.xpose.msra.mxu0 0
    %785 = vmatprep.mubr.bf16.mxu0 0
    %786 = vmatmul.mubr.bf16.gmra.mrb[0].mxu0 %v744
    %v787 = vpop.f32.mrb[0].mxu0
    %v788 = vadd.f32 0.0, %v787
    %v789 = vpop.f32.mrb[0].mxu0
    %v790 = vpop.f32.mrb[0].mxu0
    %v791 = vpop.f32.mrb[0].mxu0
    %792 = vdwg.mxu0
    %v793 = vadd.f32 %v742, %v788
    %794 = vst [vmem:[#allocation2] sm:$0xff] %v793
    %v795 = vld [vmem:[#allocation2] sm:$0xff]
    %v797 = vlaneseq
    %v798 = vshrl.u32 %v797, 7
    %v799 = vsub.s32 0, %v798
    %v800 = vrot.slane %v254, %v799
    %v802 = vadd.f32 %v795, %v800
    %803 = vst [vmem:[#allocation11] sm:$0xff] %v802
    // Predicated region
    $region50: #{tpu_custom_call.1} parent=1 // pred_check
      _
    $region51: #{tpu_custom_call.1} parent=1 // pred_check_branch
      %805 = sbr.rel (0) target = $region53
    $region52: #{tpu_custom_call.1} parent=1 // pred_region
      %s807 = ssub.s32 128, 128
      %808 = vsyncadd [#allocation5], %s807
      %s810 = sshll.u32 [#allocation11], 4
      %s811 = int_to_ptr.vmem [resolvable:$true] %s810
      %813 = dma.vmem_to_hbm [thread:$0]  %s811, 128, %s7, [#allocation5]
    $region53: #{tpu_custom_call.1} parent=1 // pred_fallthru
      _
    // Predicated region
    $region54: #{tpu_custom_call.1} parent=1 // pred_check
      _
    $region55: #{tpu_custom_call.1} parent=1 // pred_check_branch
      %815 = sbr.rel (0) target = $region57
    $region56: #{tpu_custom_call.1} parent=1 // pred_region
      %s817 = ssub.s32 128, 128
      %818 = vsyncadd [#allocation13], %s817
      %s820 = sshll.u32 [#allocation12], 4
      %s821 = int_to_ptr.vmem [resolvable:$true] %s820
      %823 = dma.vmem_to_hbm [thread:$0]  %s821, 128, %s8, [#allocation13]
    $region57: #{tpu_custom_call.1} parent=1 // pred_fallthru
      _
    // Predicated region
    $region58: #{tpu_custom_call.1} parent=1 // pred_check
      _
    $region59: #{tpu_custom_call.1} parent=1 // pred_check_branch
      %825 = sbr.rel (0) target = $region61
    $region60: #{tpu_custom_call.1} parent=1 // pred_region
      %s827 = ssub.s32 128, 128
      %828 = vsyncadd [#allocation13], %s827
      %s830 = sshll.u32 [#allocation14], 4
      %s831 = int_to_ptr.vmem [resolvable:$true] %s830
      %833 = dma.vmem_to_hbm [thread:$0]  %s831, 128, %s9, [#allocation13]
    $region61: #{tpu_custom_call.1} parent=1 // pred_fallthru
      _
    // Predicated region
    $region62: #{tpu_custom_call.1} parent=1 // pred_check
      _
    $region63: #{tpu_custom_call.1} parent=1 // pred_check_branch
      %835 = sbr.rel (0) target = $region65
    $region64: #{tpu_custom_call.1} parent=1 // pred_region
      %836 = dma.done [#allocation5], 128
    $region65: #{tpu_custom_call.1} parent=1 // pred_fallthru
      _
    // Predicated region
    $region66: #{tpu_custom_call.1} parent=1 // pred_check
      _
    $region67: #{tpu_custom_call.1} parent=1 // pred_check_branch
      %838 = sbr.rel (0) target = $region69
    $region68: #{tpu_custom_call.1} parent=1 // pred_region
      %839 = dma.done [#allocation13], 128
    $region69: #{tpu_custom_call.1} parent=1 // pred_fallthru
      _
    // Predicated region
    $region70: #{tpu_custom_call.1} parent=1 // pred_check
      _
    $region71: #{tpu_custom_call.1} parent=1 // pred_check_branch
      %841 = sbr.rel (0) target = $region73
    $region72: #{tpu_custom_call.1} parent=1 // pred_region
      %842 = dma.done [#allocation13], 128
    $region73: #{tpu_custom_call.1} parent=1 // pred_fallthru
      _
    %843 = vsyncpa [#allocation4], 1
    %844 = vsyncpa [#allocation7], 1
    %845 = vsyncpa [#allocation10], 1
    %846 = vsyncpa [#allocation5], 1
    %847 = vsyncpa [#allocation13], 1

</llo_original>
